<compile_context>
chip_gen: v7x
topology: tpu7x:2x2x1
jax: 0.10.0
libtpu: 0.0.40
codegen_flags: <defaults>
</compile_context>

<pallas_src>
import jax
import jax.numpy as jnp
from jax.experimental import pallas as pl
from jax.experimental.pallas import tpu as pltpu


def _round_up(x, m):
    return (x + m - 1) // m * m


def _linear_proj_kernel(x_ref, w_ref, b_ref, o_ref):
    x = x_ref[...]
    w = w_ref[...]
    if x.dtype != w.dtype:
        # In-kernel cast (VPU, rides in spare VALU slots): f32 activations hit
        # the bf16 MXU path with zero additional HBM passes in the wrapper.
        x = x.astype(w.dtype)
    acc = jnp.dot(x, w, preferred_element_type=jnp.float32)
    o_ref[...] = (acc + b_ref[...].astype(jnp.float32)).astype(o_ref.dtype)


def _vmem_cap_bytes():
    try:
        return int(pltpu.get_tpu_info().vmem_capacity_bytes)
    except Exception:
        return 64 << 20  # conservative fallback: v7x per-TensorCore VMEM


def linear_proj(x, weight_t, bias, *, tm=1024, tn=None, out_dtype=None):
    """y = x @ weight_t + bias on the MXU.

    x:        [N, F_in]          activations (any float dtype)
    weight_t: [F_in, d_model]    pre-transposed nn.Linear weight; pre-cast to
                                 bf16 ONCE at init for full MXU rate if desired
    bias:     [d_model] or [1, d_model]
    returns   [N, d_model] in x's dtype (or `out_dtype`).
    """
    N, F_in = x.shape
    F_in_w, d_model = weight_t.shape
    assert F_in == F_in_w, "weight_t must be [F_in, d_model]"
    bias = jnp.reshape(bias, (1, d_model))
    if out_dtype is None:
        out_dtype = x.dtype

    x_itemsize = jnp.dtype(x.dtype).itemsize
    w_itemsize = jnp.dtype(weight_t.dtype).itemsize
    o_itemsize = jnp.dtype(out_dtype).itemsize

    # Row-tile alignment follows the sublane packing of the dtype that actually
    # lands in VMEM (x stays in its HBM dtype; any cast happens in-register).
    row_align = 8 * max(1, 4 // x_itemsize)   # f32 -> 8, bf16 -> 16, int8 -> 32

    # ---- column tiling: keep the whole weight resident when it is small ------
    if tn is None:
        w_resident_bytes = 2 * _round_up(F_in, 8) * _round_up(d_model, 128) * w_itemsize
        if w_resident_bytes <= (8 << 20):
            tn = d_model                      # one column block; weight DMA'd once
        else:
            tn = 512 if d_model >= 512 else (256 if d_model >= 256 else 128)

    vmem_cap = _vmem_cap_bytes()

    def footprint(tm_):
        xb = tm_ * _round_up(F_in, 128) * x_itemsize
        wb = _round_up(F_in, 8) * _round_up(tn, 128) * w_itemsize
        bb = 8 * _round_up(tn, 128) * 4
        ob = tm_ * _round_up(tn, 128) * o_itemsize
        return 2 * (xb + wb + bb + ob)        # double-buffered pipeline

    # ---- row tile: large (amortize ~0.35 us/step), clamped to N and VMEM -----
    if tm >= N:
        tm = N                                # full-dim block is always legal
    else:
        tm = max(row_align, _round_up(min(tm, N), row_align))
    while tm > row_align and footprint(tm) > int(0.75 * vmem_cap):
        tm = max(row_align, _round_up(tm // 2, row_align))
    # TODO(synk): add a K-tiled fallback (third "arbitrary" grid axis + f32 VMEM
    # accumulator) for pathologically large F_in where even tm == row_align
    # overflows VMEM; never triggers for GATC geometries.

    # v7x has 2 TensorCores: make sure the parallel grid has >= 2 blocks
    # whenever there is enough work to split.
    if pl.cdiv(N, tm) * pl.cdiv(d_model, tn) == 1 and N > 2 * row_align:
        tm = max(row_align, _round_up(pl.cdiv(N, 2), row_align))

    grid = (pl.cdiv(N, tm), pl.cdiv(d_model, tn))

    compiler_kwargs = dict(dimension_semantics=("parallel", "parallel"))
    budget = footprint(tm) + (4 << 20)
    if budget > (16 << 20):                   # above the smallest default scoped limit (v5e)
        compiler_kwargs["vmem_limit_bytes"] = int(min(budget, int(0.85 * vmem_cap)))

    return pl.pallas_call(
        _linear_proj_kernel,
        out_shape=jax.ShapeDtypeStruct((N, d_model), out_dtype),
        grid_spec=pltpu.PrefetchScalarGridSpec(
            num_scalar_prefetch=0,
            grid=grid,
            in_specs=[
                # (tm, F_in): full, unpadded contraction dim per row tile.
                pl.BlockSpec((tm, F_in), lambda i, j: (i, 0)),
                # (F_in, tn): weight slab; index constant over the row axis, so
                # with a single column block it is DMA'd exactly once.
                pl.BlockSpec((F_in, tn), lambda i, j: (0, j)),
                # Matching bias slab, broadcast over rows in-kernel.
                pl.BlockSpec((1, tn), lambda i, j: (0, j)),
            ],
            out_specs=pl.BlockSpec((tm, tn), lambda i, j: (i, j)),
        ),
        compiler_params=pltpu.CompilerParams(**compiler_kwargs),
    )(x, weight_t, bias)


def init_linear_params(key, node_feat_dim, d_model, dtype=jnp.float32):
    """Deterministic init matching nn.Linear's shapes (uniform +/- 1/sqrt(fan_in)).

    Weight is stored pre-transposed as [node_feat_dim, d_model] so the kernel
    computes x @ W^T directly. Pre-cast the returned params to bf16 once if the
    bf16 MXU path is desired (done once at init, never per call).
    """
    kw, kb = jax.random.split(key)
    bound = 1.0 / jnp.sqrt(jnp.asarray(node_feat_dim, dtype))
    weight_t = jax.random.uniform(
        kw, (node_feat_dim, d_model), dtype, minval=-bound, maxval=bound
    )
    bias = jax.random.uniform(kb, (1, d_model), dtype, minval=-bound, maxval=bound)
    return weight_t, bias


if __name__ == "__main__":
    key = jax.random.PRNGKey(0)
    k_x, k_p = jax.random.split(key)

    N = 100             # number of nodes (rows) — deliberately not a tile multiple
    node_feat_dim = 32  # input node feature dimension
    d_model = 64        # output dimension

    x = jax.random.normal(k_x, (N, node_feat_dim), jnp.float32)
    weight_t, bias = init_linear_params(k_p, node_feat_dim, d_model)

    # Reference in plain JAX.
    y_ref = x @ weight_t + bias

    # f32 path.
    y = jax.block_until_ready(linear_proj(x, weight_t, bias))
    assert y.shape == (N, d_model)
    assert jnp.allclose(y, y_ref, atol=1e-5, rtol=1e-5)

    # bf16 path: weights pre-cast ONCE (parameters), x cast in-kernel,
    # f32 accumulation, f32 output.
    weight_bf16 = weight_t.astype(jnp.bfloat16)
    bias_bf16 = bias.astype(jnp.bfloat16)
    y_bf16 = jax.block_until_ready(linear_proj(x, weight_bf16, bias_bf16))
    assert y_bf16.dtype == jnp.float32
    assert jnp.allclose(y_bf16, y_ref, atol=5e-2, rtol=5e-2)

    print("KERNEL_OK")
</pallas_src>

<mosaic_0001>
module attributes {stable_mosaic.version = 11 : i64} {
  func.func @_linear_proj_kernel(%arg0: i32, %arg1: i32, %arg2: memref<56x32xf32, #tpu.memory_space<vmem>>, %arg3: memref<32x64xf32, #tpu.memory_space<vmem>>, %arg4: memref<1x64xf32, #tpu.memory_space<vmem>>, %arg5: memref<56x64xf32, #tpu.memory_space<vmem>>) attributes {dimension_semantics = [#tpu.dimension_semantics<parallel>, #tpu.dimension_semantics<parallel>], iteration_bounds = array<i64: 2, 1>, scalar_prefetch = 0 : i64, scratch_operands = 0 : i64, tpu.core_type = #tpu.core_type<tc>, window_params = [{transform_indices = @transform_0, window_bounds = array<i64: 56, 32>}, {transform_indices = @transform_1, window_bounds = array<i64: 32, 64>}, {transform_indices = @transform_2, window_bounds = array<i64: 1, 64>}, {transform_indices = @transform_3, window_bounds = array<i64: 56, 64>}]} {
    %c0 = arith.constant 0 : index
    %c0_0 = arith.constant 0 : index
    %0 = vector.load %arg2[%c0, %c0_0] : memref<56x32xf32, #tpu.memory_space<vmem>>, vector<56x32xf32>
    %c0_1 = arith.constant 0 : index
    %c0_2 = arith.constant 0 : index
    %1 = vector.load %arg3[%c0_1, %c0_2] : memref<32x64xf32, #tpu.memory_space<vmem>>, vector<32x64xf32>
    %cst = arith.constant dense<0.000000e+00> : vector<56x64xf32>
    %2 = tpu.matmul %0, %1, %cst {dimension_numbers = #tpu.dot_dimension_numbers<[1], [0], [0], [1], [0, 0, 1, 1], [], []>} : vector<56x32xf32>, vector<32x64xf32>, vector<56x64xf32> -> vector<56x64xf32>
    %c0_3 = arith.constant 0 : index
    %c0_4 = arith.constant 0 : index
    %3 = vector.load %arg4[%c0_3, %c0_4] : memref<1x64xf32, #tpu.memory_space<vmem>>, vector<1x64xf32>
    %4 = vector.broadcast %3 : vector<1x64xf32> to vector<56x64xf32>
    %5 = arith.addf %2, %4 : vector<56x64xf32>
    %c0_5 = arith.constant 0 : index
    %c0_6 = arith.constant 0 : index
    %6 = vector.load %arg5[%c0_5, %c0_6] : memref<56x64xf32, #tpu.memory_space<vmem>>, vector<56x64xf32>
    tpu.vector_store %arg5[%c0_5, %c0_6], %5 {strides = array<i32>} : memref<56x64xf32, #tpu.memory_space<vmem>>, vector<56x64xf32>,
    return
  }
  func.func @transform_0(%arg0: i32, %arg1: i32) -> (i32, i32) {
    %c0_i32 = arith.constant 0 : i32
    %c0_i32_0 = arith.constant 0 : i32
    return %arg0, %c0_i32 : i32, i32
  }
  func.func @transform_1(%arg0: i32, %arg1: i32) -> (i32, i32) {
    %c0_i32 = arith.constant 0 : i32
    %c0_i32_0 = arith.constant 0 : i32
    return %c0_i32, %arg1 : i32, i32
  }
  func.func @transform_2(%arg0: i32, %arg1: i32) -> (i32, i32) {
    %c0_i32 = arith.constant 0 : i32
    %c0_i32_0 = arith.constant 0 : i32
    return %c0_i32, %arg1 : i32, i32
  }
  func.func @transform_3(%arg0: i32, %arg1: i32) -> (i32, i32) {
    %c0_i32 = arith.constant 0 : i32
    return %arg0, %arg1 : i32, i32
  }
}

</mosaic_0001>

<llo_original>
// kernel: tpu_custom_call.1
$region0: #{tpu_custom_call.1}
  #allocation0 [shape = 'u32[]', space=smem, size = 0x4, offset = 0x4, fixed_abs, tag = 'smem constant byte address 0x4 - core index']
  #allocation1 [shape = 'u32[144,128]{1,0:T(1,128)}', space=vmem, size = 0x12000, scoped, tag = 'internal scratch']
  %s0 = inlined_call_operand.vmem [shape: f32[100,32], index: 0, kind: input, shape index: {}]
  %s1 = inlined_call_operand.vmem [shape: f32[32,64], index: 1, kind: input, shape index: {}]
  %s2 = inlined_call_operand.vmem [shape: f32[1,64], index: 2, kind: input, shape index: {}]
  %s3 = inlined_call_operand.vmem [shape: f32[100,64], index: 3, kind: output, shape index: {}]
  %s4 = sld [smem:[#allocation0]]
  $region93: #{tpu_custom_call.1} parent=0
    _
  %s6 = ssub.s32 1, %s4
  %s7 = scalar_select 0, %s6, %s4
  $region1: #{tpu_custom_call.1} parent=0
    #allocation2 [shape = 'u8[57344]{0}', space=vmem, size = 0xe000, scoped, tag = 'output window, operand 0']
    loop: start=0, step=1, limit=4
    $region2: #{tpu_custom_call.1} parent=1 // loop_pre_header
      _
    $region3: #{tpu_custom_call.1} parent=1 // loop_header
      %s9 = sphi 0, %s13
      %p10 = scmp.ge.s32.totalorder %s9, 4
      %s16 = sphi 0, %s28
      %s17 = sphi 0, %s24
      %s18 = sphi 0, %s16
      %s19 = sphi 0, %s17
      %s20 = sphi 0, %s18
      %s21 = sphi 0, %s19
      %s31 = sphi 0, %s33
      %s34 = sphi 0, %s31
      %s35 = sphi 0, %s34
      %s51 = sphi 0, %s35
      %s57 = sphi 0, %s59
      %s60 = sphi 0, %s57
      %s61 = sphi 0, %s60
      %s77 = sphi 0, %s61
      %s83 = sphi 0, %s85
      %s86 = sphi 0, %s83
      %s87 = sphi 0, %s86
      %s103 = sphi 0, %s87
      %s111 = sphi 0, %s113
      %s114 = sphi 0, %s111
      %s115 = sphi 0, %s114
      %s131 = sphi 0, %s115
    $region4: #{tpu_custom_call.1} parent=1 // loop_header_branch
      %12 = sbr.rel (%p10) target = $region8
    $region5: #{tpu_custom_call.1} parent=1 // loop_body
      %s14 = ssub.s32 %s9, 1
      %s15 = ssub.s32 %s9, 2
      %s22 = sadd.s32 1, %s17
      %p23 = scmp.ge.s32.totalorder %s22, 1
      %s24 = scalar_select %p23, 0, %s22
      %s25 = sadd.s32 1, %s16
      %s26 = scalar_select %p23, %s25, %s16
      %p27 = scmp.ge.s32.totalorder %s26, 2
      %s28 = scalar_select %p27, 0, %s26
      %s29 = ssub.s32 %s16, %s28
      %p30 = scmp.eq.s32.totalorder %s29, 0
      %s32 = sadd.s32 %s31, 1
      %s33 = scalar_select %p30, %s31, %s32
      %p36 = pneg %p30
      %p37 = scmp.eq.s32.totalorder %s9, 1
      %p38 = por %p36, %p37
      %p39 = scmp.ne.s32.totalorder %s31, %s34
      %p40 = scmp.eq.s32.totalorder %s9, 0
      %p41 = por %p39, %p40
      %p42 = scmp.ne.s32.totalorder %s31, %s34
      %p43 = scmp.eq.s32.totalorder %s14, 1
      %p44 = por %p42, %p43
      %p45 = scmp.ne.s32.totalorder %s34, %s35
      %p46 = scmp.eq.s32.totalorder %s14, 0
      %p47 = por %p45, %p46
      %p48 = scmp.ne.s32.totalorder %s34, %s35
      %p49 = scmp.eq.s32.totalorder %s15, 1
      %p50 = por %p48, %p49
      %p52 = scmp.ne.s32.totalorder %s35, %s51
      %p53 = scmp.eq.s32.totalorder %s15, 0
      %p54 = por %p52, %p53
      %s55 = ssub.s32 %s17, %s24
      %p56 = scmp.eq.s32.totalorder %s55, 0
      %s58 = sadd.s32 %s57, 1
      %s59 = scalar_select %p56, %s57, %s58
      %p62 = pneg %p56
      %p63 = scmp.eq.s32.totalorder %s9, 1
      %p64 = por %p62, %p63
      %p65 = scmp.ne.s32.totalorder %s57, %s60
      %p66 = scmp.eq.s32.totalorder %s9, 0
      %p67 = por %p65, %p66
      %p68 = scmp.ne.s32.totalorder %s57, %s60
      %p69 = scmp.eq.s32.totalorder %s14, 1
      %p70 = por %p68, %p69
      %p71 = scmp.ne.s32.totalorder %s60, %s61
      %p72 = scmp.eq.s32.totalorder %s14, 0
      %p73 = por %p71, %p72
      %p74 = scmp.ne.s32.totalorder %s60, %s61
      %p75 = scmp.eq.s32.totalorder %s15, 1
      %p76 = por %p74, %p75
      %p78 = scmp.ne.s32.totalorder %s61, %s77
      %p79 = scmp.eq.s32.totalorder %s15, 0
      %p80 = por %p78, %p79
      %s81 = ssub.s32 %s17, %s24
      %p82 = scmp.eq.s32.totalorder %s81, 0
      %s84 = sadd.s32 %s83, 1
      %s85 = scalar_select %p82, %s83, %s84
      %p88 = pneg %p82
      %p89 = scmp.eq.s32.totalorder %s9, 1
      %p90 = por %p88, %p89
      %p91 = scmp.ne.s32.totalorder %s83, %s86
      %p92 = scmp.eq.s32.totalorder %s9, 0
      %p93 = por %p91, %p92
      %p94 = scmp.ne.s32.totalorder %s83, %s86
      %p95 = scmp.eq.s32.totalorder %s14, 1
      %p96 = por %p94, %p95
      %p97 = scmp.ne.s32.totalorder %s86, %s87
      %p98 = scmp.eq.s32.totalorder %s14, 0
      %p99 = por %p97, %p98
      %p100 = scmp.ne.s32.totalorder %s86, %s87
      %p101 = scmp.eq.s32.totalorder %s15, 1
      %p102 = por %p100, %p101
      %p104 = scmp.ne.s32.totalorder %s87, %s103
      %p105 = scmp.eq.s32.totalorder %s15, 0
      %p106 = por %p104, %p105
      %s107 = ssub.s32 %s16, %s28
      %s108 = ssub.s32 %s17, %s24
      %s109 = sor.u32 %s107, %s108
      %p110 = scmp.eq.s32.totalorder %s109, 0
      %s112 = sadd.s32 %s111, 1
      %s113 = scalar_select %p110, %s111, %s112
      %p116 = pneg %p110
      %p117 = scmp.eq.s32.totalorder %s9, 1
      %p118 = por %p116, %p117
      %p119 = scmp.ne.s32.totalorder %s111, %s114
      %p120 = scmp.eq.s32.totalorder %s9, 0
      %p121 = por %p119, %p120
      %p122 = scmp.ne.s32.totalorder %s111, %s114
      %p123 = scmp.eq.s32.totalorder %s14, 1
      %p124 = por %p122, %p123
      %p125 = scmp.ne.s32.totalorder %s114, %s115
      %p126 = scmp.eq.s32.totalorder %s14, 0
      %p127 = por %p125, %p126
      %p128 = scmp.ne.s32.totalorder %s114, %s115
      %p129 = scmp.eq.s32.totalorder %s15, 1
      %p130 = por %p128, %p129
      %p132 = scmp.ne.s32.totalorder %s115, %s131
      %p133 = scmp.eq.s32.totalorder %s15, 0
      %p134 = por %p132, %p133
      %p135 = scmp.le.s32.totalorder 1, %s9
      %p136 = scmp.lt.s32.totalorder %s9, 3
      %p137 = pnand %p135, %p136
      %p138 = pneg %p137
      // Predicated region
      $region9: #{tpu_custom_call.1} parent=5 // pred_check
        _
      $region10: #{tpu_custom_call.1} parent=5 // pred_check_branch
        %140 = sbr.rel (%p137) target = $region12
      $region11: #{tpu_custom_call.1} parent=5 // pred_region
        %s141 = ssub.s32 %s9, 1
        // Predicated region
        $region13: #{tpu_custom_call.1} parent=11 // pred_check
          %p142 = pneg %p73
        $region14: #{tpu_custom_call.1} parent=11 // pred_check_branch
          %144 = sbr.rel (%p142) target = $region16
        $region15: #{tpu_custom_call.1} parent=11 // pred_region
          %p145 = scmp.lt.s32.totalorder %s19, 0
          %s146 = scalar_select %p145, %s19, 0
          %s147 = smul.addr %s146, 8
          %s148 = scalar_lea.vmem %s1, %s147
        $region16: #{tpu_custom_call.1} parent=11 // pred_fallthru
          _
        // Predicated region
        $region17: #{tpu_custom_call.1} parent=11 // pred_check
          %p149 = pneg %p99
        $region18: #{tpu_custom_call.1} parent=11 // pred_check_branch
          %151 = sbr.rel (%p149) target = $region20
        $region19: #{tpu_custom_call.1} parent=11 // pred_region
          %p152 = scmp.lt.s32.totalorder %s19, 0
          %s153 = scalar_select %p152, %s19, 0
          %s154 = scalar_lea.vmem %s2, %s153
        $region20: #{tpu_custom_call.1} parent=11 // pred_fallthru
          _
      $region12: #{tpu_custom_call.1} parent=5 // pred_fallthru
        _
      %p155 = scmp.lt.s32.totalorder %s9, 2
      // Predicated region
      $region21: #{tpu_custom_call.1} parent=5 // pred_check
        %p156 = pneg %p155
      $region22: #{tpu_custom_call.1} parent=5 // pred_check_branch
        %158 = sbr.rel (%p156) target = $region24
      $region23: #{tpu_custom_call.1} parent=5 // pred_region
        // Predicated region
        $region25: #{tpu_custom_call.1} parent=23 // pred_check
          %p159 = pneg %p41
        $region26: #{tpu_custom_call.1} parent=23 // pred_check_branch
          %161 = sbr.rel (%p159) target = $region28
        $region27: #{tpu_custom_call.1} parent=23 // pred_region
          %s162 = smul.u32 7, %s16
          %s163 = ssub.s32 13, %s162
          %p164 = scmp.lt.s32.totalorder %s163, 7
          %s165 = scalar_select %p164, %s163, 7
          %s166 = smul.u32 128, %s165
          %p167 = scmp.lt.s32.totalorder %s162, 12
          %s168 = scalar_select %p167, %s162, 12
          %s169 = smul.addr %s168, 8
          %s170 = scalar_lea.vmem %s0, %s169
          %s171 = smul.u32 7, %s16
          %s172 = ssub.s32 13, %s171
          %p173 = scmp.lt.s32.totalorder %s172, 7
          %s174 = scalar_select %p173, %s172, 7
          %s175 = smul.u32 128, %s174
        $region28: #{tpu_custom_call.1} parent=23 // pred_fallthru
          _
      $region24: #{tpu_custom_call.1} parent=5 // pred_fallthru
        _
      %p176 = scmp.le.s32.totalorder 1, %s9
      %p177 = scmp.lt.s32.totalorder %s9, 3
      %p178 = pnand %p176, %p177
      %p179 = pneg %p178
      // Predicated region
      $region29: #{tpu_custom_call.1} parent=5 // pred_check
        _
      $region30: #{tpu_custom_call.1} parent=5 // pred_check_branch
        %181 = sbr.rel (%p178) target = $region32
      $region31: #{tpu_custom_call.1} parent=5 // pred_region
        %s182 = ssub.s32 %s9, 1
        %s183 = smul.u32 7, %s18
        %s184 = ssub.s32 13, %s183
        %p185 = scmp.lt.s32.totalorder %s184, 7
        %s186 = scalar_select %p185, %s184, 7
        %s187 = smul.u32 128, %s186
        %p188 = scmp.lt.s32.totalorder %s183, 12
        %s189 = scalar_select %p188, %s183, 12
        %s190 = smul.addr %s189, 8
        %s191 = scalar_lea.vmem %s0, %s190
        %p192 = pneg %p47
        %p193 = pneg %p44
        %p194 = scmp.lt.s32.totalorder %s19, 0
        %s195 = scalar_select %p194, %s19, 0
        %s196 = smul.addr %s195, 8
        %s197 = scalar_lea.vmem %s1, %s196
        %p198 = pneg %p73
        %p199 = pneg %p70
        %p200 = scmp.lt.s32.totalorder %s19, 0
        %s201 = scalar_select %p200, %s19, 0
        %s202 = scalar_lea.vmem %s2, %s201
        %p203 = pneg %p99
        %p204 = pneg %p96
        %p205 = pneg %p127
        %p206 = pneg %p124
        %s207 = sand.u32 %s114, 1
        %s208 = sand.u32 %s114, 1
        %s209 = smul.addr %s208, 56
        %s210 = scalar_lea.vmem [#allocation2], %s209
        %s211 = smul.u32 7, %s18
        %s212 = ssub.s32 13, %s211
        %p213 = scmp.lt.s32.totalorder %s212, 7
        %s214 = scalar_select %p213, %s212, 7
        %s215 = smul.u32 128, %s214
        %p216 = scmp.lt.s32.totalorder %s211, 12
        %s217 = scalar_select %p216, %s211, 12
        %s218 = smul.addr %s217, 8
        %s219 = scalar_lea.vmem %s0, %s218
        %s220 = smul.u32 7, %s18
        %s221 = ssub.s32 13, %s220
        %p222 = scmp.lt.s32.totalorder %s221, 7
        %s223 = scalar_select %p222, %s221, 7
        %s224 = smul.u32 128, %s223
        %p225 = scmp.lt.s32.totalorder %s19, 0
        %s226 = scalar_select %p225, %s19, 0
        %s227 = smul.addr %s226, 8
        %s228 = scalar_lea.vmem %s1, %s227
        %p229 = scmp.lt.s32.totalorder %s19, 0
        %s230 = scalar_select %p229, %s19, 0
        %s231 = scalar_lea.vmem %s2, %s230
        %s232 = smul.u32 7, %s18
        %s233 = ssub.s32 13, %s232
        %p234 = scmp.lt.s32.totalorder %s233, 7
        %s235 = scalar_select %p234, %s233, 7
        %s236 = smul.u32 128, %s235
        %v237 = vld [vmem:[%s219] sm:$0xff]
        %v238 = vld [vmem:[%s219 + $0x8] sm:$0xff]
        %v239 = vld [vmem:[%s219 + $0x10] sm:$0xff]
        %v240 = vld [vmem:[%s219 + $0x18] sm:$0xff]
        %v241 = vld [vmem:[%s219 + $0x20] sm:$0xff]
        %v242 = vld [vmem:[%s219 + $0x28] sm:$0xff]
        %v243 = vld [vmem:[%s219 + $0x30] sm:$0xff]
        %v244 = vld [vmem:[%s228] sm:$0xff]
        %v245 = vld [vmem:[%s228 + $0x8] sm:$0xff]
        %v246 = vld [vmem:[%s228 + $0x10] sm:$0xff]
        %v247 = vld [vmem:[%s228 + $0x18] sm:$0xff]
        %v248 = vld [vmem:[%s231] sm:$0x1]
        %v250 = vlaneseq
        %v251 = vshrl.u32 %v250, 7
        %v252 = vsub.s32 0, %v251
        %v253 = vrot.slane %v248, %v252
        %vm255 = vcmask 261120
        %v257 = vsel %vm255, %v237, 0
        %v260 = vsel %vm255, %v238, 0
        %v263 = vsel %vm255, %v239, 0
        %v266 = vsel %vm255, %v240, 0
        %v269 = vsel %vm255, %v241, 0
        %v272 = vsel %vm255, %v242, 0
        %v275 = vsel %vm255, %v243, 0
        %277 = vmatprep.subr.mxu0 0.0
        %278 = vmatpush1.msra.mxu0 %v244
        %279 = vmatprep.subr.mxu0 0.0
        %280 = vmatpush1.msra.mxu0 %v245
        %281 = vmatprep.subr.mxu0 0.0
        %282 = vmatpush1.msra.mxu0 %v246
        %283 = vmatprep.subr.mxu0 0.0
        %284 = vmatpush1.msra.mxu0 %v247
        %285 = vmatprep.subr.mxu0 0.0
        %286 = vmatpush1.msra.mxu0 0.0
        %287 = vmatprep.subr.mxu0 0.0
        %288 = vmatpush1.msra.mxu0 0.0
        %289 = vmatprep.subr.mxu0 0.0
        %290 = vmatpush1.msra.mxu0 0.0
        %291 = vmatprep.subr.mxu0 0.0
        %292 = vmatpush1.msra.mxu0 0.0
        %293 = vmatprep.subr.mxu0 0.0
        %294 = vmatpush1.msra.mxu0 0.0
        %295 = vmatprep.subr.mxu0 0.0
        %296 = vmatpush1.msra.mxu0 0.0
        %297 = vmatprep.subr.mxu0 0.0
        %298 = vmatpush1.msra.mxu0 0.0
        %299 = vmatprep.subr.mxu0 0.0
        %300 = vmatpush1.msra.mxu0 0.0
        %301 = vmatprep.subr.mxu0 0.0
        %302 = vmatpush1.msra.mxu0 0.0
        %303 = vmatprep.subr.mxu0 0.0
        %304 = vmatpush1.msra.mxu0 0.0
        %305 = vmatprep.subr.mxu0 0.0
        %306 = vmatpush1.msra.mxu0 0.0
        %307 = vmatprep.subr.mxu0 0.0
        %308 = vmatpush1.msra.mxu0 0.0
        %309 = vmatprep.subr.mxu0 0.0
        %310 = vmatpush1.msra.mxu0 0.0
        %311 = vmatprep.subr.mxu0 0.0
        %312 = vmatpush1.msra.mxu0 0.0
        %313 = vmatprep.subr.mxu0 0.0
        %314 = vmatpush1.msra.mxu0 0.0
        %315 = vmatprep.subr.mxu0 0.0
        %316 = vmatpush1.msra.mxu0 0.0
        %317 = vmatprep.subr.mxu0 0.0
        %318 = vmatpush1.msra.mxu0 0.0
        %319 = vmatprep.subr.mxu0 0.0
        %320 = vmatpush1.msra.mxu0 0.0
        %321 = vmatprep.subr.mxu0 0.0
        %322 = vmatpush1.msra.mxu0 0.0
        %323 = vmatprep.subr.mxu0 0.0
        %324 = vmatpush1.msra.mxu0 0.0
        %325 = vmatprep.subr.mxu0 0.0
        %326 = vmatpush1.msra.mxu0 0.0
        %327 = vmatprep.subr.mxu0 0.0
        %328 = vmatpush1.msra.mxu0 0.0
        %329 = vmatprep.subr.mxu0 0.0
        %330 = vmatpush1.msra.mxu0 0.0
        %331 = vmatprep.subr.mxu0 0.0
        %332 = vmatpush1.msra.mxu0 0.0
        %333 = vmatprep.subr.mxu0 0.0
        %334 = vmatpush1.msra.mxu0 0.0
        %335 = vmatprep.subr.mxu0 0.0
        %336 = vmatpush1.msra.mxu0 0.0
        %337 = vmatprep.subr.mxu0 0.0
        %338 = vmatpush1.msra.mxu0 0.0
        %339 = vmatprep.subr.mxu0 0.0
        %340 = vmatpush1.msra.mxu0 0.0
        %341 = vmatprep.mubr.f32.mxu0 0.0
        %342 = vmatmul.mubr.f32.gmra.mrb[0].mxu0 %v257
        %v343 = vpop.f32.mrb[0].mxu0
        %v344 = vadd.f32 %v253, %v343
        %v345 = vpop.f32.mrb[0].mxu0
        %346 = vmatprep.mubr.f32.mxu0 0.0
        %347 = vmatmul.mubr.f32.gmra.mrb[0].mxu0 %v260
        %v348 = vpop.f32.mrb[0].mxu0
        %v349 = vadd.f32 %v253, %v348
        %v350 = vpop.f32.mrb[0].mxu0
        %351 = vmatprep.mubr.f32.mxu0 0.0
        %352 = vmatmul.mubr.f32.gmra.mrb[0].mxu0 %v263
        %v353 = vpop.f32.mrb[0].mxu0
        %v354 = vadd.f32 %v253, %v353
        %v355 = vpop.f32.mrb[0].mxu0
        %356 = vmatprep.mubr.f32.mxu0 0.0
        %357 = vmatmul.mubr.f32.gmra.mrb[0].mxu0 %v266
        %v358 = vpop.f32.mrb[0].mxu0
        %v359 = vadd.f32 %v253, %v358
        %v360 = vpop.f32.mrb[0].mxu0
        %361 = vmatprep.mubr.f32.mxu0 0.0
        %362 = vmatmul.mubr.f32.gmra.mrb[0].mxu0 %v269
        %v363 = vpop.f32.mrb[0].mxu0
        %v364 = vadd.f32 %v253, %v363
        %v365 = vpop.f32.mrb[0].mxu0
        %366 = vmatprep.mubr.f32.mxu0 0.0
        %367 = vmatmul.mubr.f32.gmra.mrb[0].mxu0 %v272
        %v368 = vpop.f32.mrb[0].mxu0
        %v369 = vadd.f32 %v253, %v368
        %v370 = vpop.f32.mrb[0].mxu0
        %371 = vmatprep.mubr.f32.mxu0 0.0
        %372 = vmatmul.mubr.f32.gmra.mrb[0].mxu0 %v275
        %v373 = vpop.f32.mrb[0].mxu0
        %v374 = vadd.f32 %v253, %v373
        %v375 = vpop.f32.mrb[0].mxu0
        %376 = vdwg.mxu0
        %vm377 = vcmask 523264
        %378 = vst.msk [vmem:[%s210] sm:$0xff] %vm377, %v344
        %379 = vst.msk [vmem:[%s210 + $0x8] sm:$0xff] %vm377, %v349
        %380 = vst.msk [vmem:[%s210 + $0x10] sm:$0xff] %vm377, %v354
        %381 = vst.msk [vmem:[%s210 + $0x18] sm:$0xff] %vm377, %v359
        %382 = vst.msk [vmem:[%s210 + $0x20] sm:$0xff] %vm377, %v364
        %383 = vst.msk [vmem:[%s210 + $0x28] sm:$0xff] %vm377, %v369
        %384 = vst.msk [vmem:[%s210 + $0x30] sm:$0xff] %vm377, %v374
        %s385 = sand.u32 %s114, 1
        %s386 = sand.u32 %s114, 1
        %s387 = smul.addr %s386, 56
        %s388 = scalar_lea.vmem [#allocation2], %s387
        // Predicated region
        $region33: #{tpu_custom_call.1} parent=31 // pred_check
          %p389 = pneg %p124
        $region34: #{tpu_custom_call.1} parent=31 // pred_check_branch
          %391 = sbr.rel (%p389) target = $region36
        $region35: #{tpu_custom_call.1} parent=31 // pred_region
          %s392 = smul.u32 7, %s18
          %s393 = ssub.s32 13, %s392
          %p394 = scmp.lt.s32.totalorder %s393, 7
          %s395 = scalar_select %p394, %s393, 7
          %s396 = smul.u32 128, %s395
          %p397 = scmp.ne.s32.totalorder 0, %s396
          %s398 = sadd.s32 %s19, %s392
          %s399 = smul.addr %s398, 8
          %s400 = scalar_lea.vmem %s3, %s399
          // Predicated region
          $region37: #{tpu_custom_call.1} parent=35 // pred_check
            %p401 = pneg %p397
          $region38: #{tpu_custom_call.1} parent=35 // pred_check_branch
            %403 = sbr.rel (%p401) target = $region40
          $region39: #{tpu_custom_call.1} parent=35 // pred_region
            // Predicated region
            $region41: #{tpu_custom_call.1} parent=39 // pred_check
              _
            $region42: #{tpu_custom_call.1} parent=39 // pred_check_branch
              %405 = sbr.rel (0) target = $region44
            $region43: #{tpu_custom_call.1} parent=39 // pred_region
              // Predicated region
              $region63: #{tpu_custom_call.1} parent=43 // pred_check
                _
              $region64: #{tpu_custom_call.1} parent=43 // pred_check_branch
                %467 = sbr.rel (0) target = $region66
              $region65: #{tpu_custom_call.1} parent=43 // pred_region
                %s468 = sdiv.u32.pop %s395, 7
                %s469 = srem.u32.pop %s395, 7
                // While loop
                $region67: #{tpu_custom_call.1} parent=65 // loop_pre_header
                  _
                $region68: #{tpu_custom_call.1} parent=65 // loop_header
                  %s471 = sphi 0, %s473
                  %p472 = scmp.ge.s32.totalorder %s471, %s468
                  %s476 = sphi 0, %s495
                  %s477 = sphi %s388, %s498
                  %s478 = sphi %s400, %s499
                $region69: #{tpu_custom_call.1} parent=65 // loop_header_branch
                  %475 = sbr.rel (%p472) target = $region73
                $region70: #{tpu_custom_call.1} parent=65 // loop_body
                  %v479 = vld [vmem:[%s477] sm:$0xff]
                  %480 = vst [vmem:[%s478] sm:$0xff] %v479
                  %v481 = vld [vmem:[%s477 + $0x8] sm:$0xff]
                  %482 = vst [vmem:[%s478 + $0x8] sm:$0xff] %v481
                  %v483 = vld [vmem:[%s477 + $0x10] sm:$0xff]
                  %484 = vst [vmem:[%s478 + $0x10] sm:$0xff] %v483
                  %v485 = vld [vmem:[%s477 + $0x18] sm:$0xff]
                  %486 = vst [vmem:[%s478 + $0x18] sm:$0xff] %v485
                  %v487 = vld [vmem:[%s477 + $0x20] sm:$0xff]
                  %488 = vst [vmem:[%s478 + $0x20] sm:$0xff] %v487
                  %v489 = vld [vmem:[%s477 + $0x28] sm:$0xff]
                  %490 = vst [vmem:[%s478 + $0x28] sm:$0xff] %v489
                  %v491 = vld [vmem:[%s477 + $0x30] sm:$0xff]
                  %492 = vst [vmem:[%s478 + $0x30] sm:$0xff] %v491
                  %s493 = sadd.s32 1, %s476
                  %p494 = scmp.ge.s32.totalorder %s493, %s468
                  %s495 = scalar_select %p494, 0, %s493
                  %s496 = smul.u32 %s495, 56
                  %s497 = smul.u32 %s495, 56
                  %s498 = scalar_lea.vmem %s388, %s496 [#allocation2]
                  %s499 = scalar_lea.vmem %s400, %s497
                $region71: #{tpu_custom_call.1} parent=65 // loop_footer
                  %s473 = sadd.s32 %s471, 1
                $region72: #{tpu_custom_call.1} parent=65 // loop_footer_branch
                  %470 = sbr.rel target = $region68
                $region73: #{tpu_custom_call.1} parent=65 // loop_exit
                  _
                %s500 = sdiv.u32.pop %s395, 7
                %s501 = srem.u32.pop %s395, 7
                %s502 = smul.u32 %s500, 7
                %s503 = smul.u32 8, %s502
                %s504 = scalar_lea.vmem %s388, %s503 [#allocation2]
                %s505 = smul.u32 8, %s502
                %s506 = scalar_lea.vmem %s400, %s505
                // While loop
                $region74: #{tpu_custom_call.1} parent=65 // loop_pre_header
                  _
                $region75: #{tpu_custom_call.1} parent=65 // loop_header
                  %s508 = sphi 0, %s510
                  %p509 = scmp.ge.s32.totalorder %s508, %s501
                  %s513 = sphi 0, %s520
                  %s514 = sphi %s504, %s523
                  %s515 = sphi %s506, %s524
                $region76: #{tpu_custom_call.1} parent=65 // loop_header_branch
                  %512 = sbr.rel (%p509) target = $region80
                $region77: #{tpu_custom_call.1} parent=65 // loop_body
                  %v516 = vld [vmem:[%s514] sm:$0xff]
                  %517 = vst [vmem:[%s515] sm:$0xff] %v516
                  %s518 = sadd.s32 1, %s513
                  %p519 = scmp.ge.s32.totalorder %s518, %s501
                  %s520 = scalar_select %p519, 0, %s518
                  %s521 = smul.u32 %s520, 8
                  %s522 = smul.u32 %s520, 8
                  %s523 = scalar_lea.vmem %s504, %s521 [#allocation2]
                  %s524 = scalar_lea.vmem %s506, %s522
                $region78: #{tpu_custom_call.1} parent=65 // loop_footer
                  %s510 = sadd.s32 %s508, 1
                $region79: #{tpu_custom_call.1} parent=65 // loop_footer_branch
                  %507 = sbr.rel target = $region75
                $region80: #{tpu_custom_call.1} parent=65 // loop_exit
                  _
              $region66: #{tpu_custom_call.1} parent=43 // pred_fallthru
                _
              // Predicated region
              $region81: #{tpu_custom_call.1} parent=43 // pred_check
                _
              $region82: #{tpu_custom_call.1} parent=43 // pred_check_branch
                %526 = sbr.rel target = $region84
              $region83: #{tpu_custom_call.1} parent=43 // pred_region
                _
              $region84: #{tpu_custom_call.1} parent=43 // pred_fallthru
                _
            $region44: #{tpu_custom_call.1} parent=39 // pred_fallthru
              _
            // Predicated region
            $region45: #{tpu_custom_call.1} parent=39 // pred_check
              _
            $region46: #{tpu_custom_call.1} parent=39 // pred_check_branch
              %407 = sbr.rel target = $region48
            $region47: #{tpu_custom_call.1} parent=39 // pred_region
              %s409 = sdiv.u32.pop %s395, 7
              %s410 = srem.u32.pop %s395, 7
              // While loop
              $region49: #{tpu_custom_call.1} parent=47 // loop_pre_header
                _
              $region50: #{tpu_custom_call.1} parent=47 // loop_header
                %s412 = sphi 0, %s414
                %p413 = scmp.ge.s32.totalorder %s412, %s409
                %s417 = sphi 0, %s436
                %s418 = sphi %s388, %s439
                %s419 = sphi %s400, %s440
              $region51: #{tpu_custom_call.1} parent=47 // loop_header_branch
                %416 = sbr.rel (%p413) target = $region55
              $region52: #{tpu_custom_call.1} parent=47 // loop_body
                %v420 = vld [vmem:[%s418] sm:$0xff]
                %421 = vst [vmem:[%s419] sm:$0xff] %v420
                %v422 = vld [vmem:[%s418 + $0x8] sm:$0xff]
                %423 = vst [vmem:[%s419 + $0x8] sm:$0xff] %v422
                %v424 = vld [vmem:[%s418 + $0x10] sm:$0xff]
                %425 = vst [vmem:[%s419 + $0x10] sm:$0xff] %v424
                %v426 = vld [vmem:[%s418 + $0x18] sm:$0xff]
                %427 = vst [vmem:[%s419 + $0x18] sm:$0xff] %v426
                %v428 = vld [vmem:[%s418 + $0x20] sm:$0xff]
                %429 = vst [vmem:[%s419 + $0x20] sm:$0xff] %v428
                %v430 = vld [vmem:[%s418 + $0x28] sm:$0xff]
                %431 = vst [vmem:[%s419 + $0x28] sm:$0xff] %v430
                %v432 = vld [vmem:[%s418 + $0x30] sm:$0xff]
                %433 = vst [vmem:[%s419 + $0x30] sm:$0xff] %v432
                %s434 = sadd.s32 1, %s417
                %p435 = scmp.ge.s32.totalorder %s434, %s409
                %s436 = scalar_select %p435, 0, %s434
                %s437 = smul.u32 %s436, 56
                %s438 = smul.u32 %s436, 56
                %s439 = scalar_lea.vmem %s388, %s437 [#allocation2]
                %s440 = scalar_lea.vmem %s400, %s438
              $region53: #{tpu_custom_call.1} parent=47 // loop_footer
                %s414 = sadd.s32 %s412, 1
              $region54: #{tpu_custom_call.1} parent=47 // loop_footer_branch
                %411 = sbr.rel target = $region50
              $region55: #{tpu_custom_call.1} parent=47 // loop_exit
                _
              %s441 = sdiv.u32.pop %s395, 7
              %s442 = srem.u32.pop %s395, 7
              %s443 = smul.u32 %s441, 7
              %s444 = smul.u32 8, %s443
              %s445 = scalar_lea.vmem %s388, %s444 [#allocation2]
              %s446 = smul.u32 8, %s443
              %s447 = scalar_lea.vmem %s400, %s446
              // While loop
              $region56: #{tpu_custom_call.1} parent=47 // loop_pre_header
                _
              $region57: #{tpu_custom_call.1} parent=47 // loop_header
                %s449 = sphi 0, %s451
                %p450 = scmp.ge.s32.totalorder %s449, %s442
                %s454 = sphi 0, %s461
                %s455 = sphi %s445, %s464
                %s456 = sphi %s447, %s465
              $region58: #{tpu_custom_call.1} parent=47 // loop_header_branch
                %453 = sbr.rel (%p450) target = $region62
              $region59: #{tpu_custom_call.1} parent=47 // loop_body
                %v457 = vld [vmem:[%s455] sm:$0xff]
                %458 = vst [vmem:[%s456] sm:$0xff] %v457
                %s459 = sadd.s32 1, %s454
                %p460 = scmp.ge.s32.totalorder %s459, %s442
                %s461 = scalar_select %p460, 0, %s459
                %s462 = smul.u32 %s461, 8
                %s463 = smul.u32 %s461, 8
                %s464 = scalar_lea.vmem %s445, %s462 [#allocation2]
                %s465 = scalar_lea.vmem %s447, %s463
              $region60: #{tpu_custom_call.1} parent=47 // loop_footer
                %s451 = sadd.s32 %s449, 1
              $region61: #{tpu_custom_call.1} parent=47 // loop_footer_branch
                %448 = sbr.rel target = $region57
              $region62: #{tpu_custom_call.1} parent=47 // loop_exit
                _
            $region48: #{tpu_custom_call.1} parent=39 // pred_fallthru
              _
          $region40: #{tpu_custom_call.1} parent=35 // pred_fallthru
            _
          %527 = vnop
        $region36: #{tpu_custom_call.1} parent=31 // pred_fallthru
          _
      $region32: #{tpu_custom_call.1} parent=5 // pred_fallthru
        _
      %p528 = scmp.le.s32.totalorder 2, %s9
      // Predicated region
      $region85: #{tpu_custom_call.1} parent=5 // pred_check
        %p529 = pneg %p528
      $region86: #{tpu_custom_call.1} parent=5 // pred_check_branch
        %531 = sbr.rel (%p529) target = $region88
      $region87: #{tpu_custom_call.1} parent=5 // pred_region
        %s532 = ssub.s32 %s9, 2
        // Predicated region
        $region89: #{tpu_custom_call.1} parent=87 // pred_check
          %p533 = pneg %p130
        $region90: #{tpu_custom_call.1} parent=87 // pred_check_branch
          %535 = sbr.rel (%p533) target = $region92
        $region91: #{tpu_custom_call.1} parent=87 // pred_region
          %s536 = sand.u32 %s115, 1
          %s537 = sand.u32 %s115, 1
          %s538 = smul.addr %s537, 56
          %s539 = scalar_lea.vmem [#allocation2], %s538
        $region92: #{tpu_custom_call.1} parent=87 // pred_fallthru
          _
      $region88: #{tpu_custom_call.1} parent=5 // pred_fallthru
        _
    $region6: #{tpu_custom_call.1} parent=1 // loop_footer
      %s13 = sadd.s32 1, %s9
    $region7: #{tpu_custom_call.1} parent=1 // loop_footer_branch
      %8 = sbr.rel target = $region3
    $region8: #{tpu_custom_call.1} parent=1 // loop_exit
      _

</llo_original>
